<compile_context>
chip_gen: v5e
topology: v5e:2x2
jax: 0.10.0
libtpu: 0.0.40
codegen_flags: <defaults>
</compile_context>

<pallas_src>
import functools

import numpy as np
import jax
import jax.numpy as jnp
from jax.experimental import pallas as pl
from jax.experimental.pallas import tpu as pltpu


# --------------------------------------------------------------------------- #
# host-side operator construction
# --------------------------------------------------------------------------- #
def bilinear_matrix(out_size: int, in_size: int) -> np.ndarray:
    """Row-stochastic matrix reproducing F.interpolate(..., mode='bilinear',
    align_corners=False) along one axis:  out = M @ in."""
    scale = in_size / out_size
    dst = np.arange(out_size, dtype=np.float64)
    src = (dst + 0.5) * scale - 0.5
    src = np.clip(src, 0.0, in_size - 1)
    i0 = np.floor(src).astype(np.int64)
    i1 = np.minimum(i0 + 1, in_size - 1)
    frac = src - i0
    M = np.zeros((out_size, in_size), dtype=np.float32)
    M[np.arange(out_size), i0] += (1.0 - frac).astype(np.float32)
    M[np.arange(out_size), i1] += frac.astype(np.float32)
    return M


@functools.lru_cache(maxsize=None)
def _width_operator(W, Ws):
    """Aw^T, so the width contraction is a single (rows, Ws) @ (Ws, W) matmul."""
    return np.ascontiguousarray(bilinear_matrix(W, Ws).T)          # (Ws, W)


@functools.lru_cache(maxsize=None)
def _height_operator(H, Hs, c_out, th):
    """Block-diagonal height operator, one contiguous row block per spatial tile.

    Rows are ordered (tile t, channel c, local row p); block t equals
    kron(I_{c_out}, Ah[t*th:(t+1)*th, :]) so the height contraction is one
    plain 2-D matmul whose result is already laid out as (c_out, th, W)."""
    Ah = bilinear_matrix(H, Hs)                                     # (H, Hs)
    T = H // th
    bh = np.zeros((T, c_out, th, c_out, Hs), np.float32)
    for c in range(c_out):
        bh[:, c, :, c, :] = Ah.reshape(T, th, Hs)
    return bh.reshape(T * c_out * th, c_out * Hs)


# --------------------------------------------------------------------------- #
# VMEM budget / tile-size derivation
# --------------------------------------------------------------------------- #
def _pad8(n):
    return ((n + 7) // 8) * 8


def _pad128(n):
    return ((n + 127) // 128) * 128


def _vmem_budget_bytes():
    """~75% of physical VMEM (=> ~48 MiB on v7x, ~96 MiB on v5e/v6e)."""
    try:
        cap = int(pltpu.get_tpu_info().vmem_capacity_bytes)
    except Exception:
        cap = 64 * 1024 * 1024
    return (cap // 4) * 3


def _pick_row_tile(H, W, Hs, Ws, c_in, c_out, in_bytes, budget):
    """Largest th (multiple of 8 dividing H) whose pass-2 working set fits VMEM."""
    w_pad = _pad128(W)
    fixed = (_pad8(c_out * Hs) * _pad128(Ws) * in_bytes             # xs2 (per image)
             + _pad8(Ws) * w_pad * in_bytes)                        # Aw^T
    cands = [t for t in range(8, H + 1, 8) if H % t == 0] or [H]
    best = None
    for th in cands:
        per = (c_in * _pad8(th) * w_pad * in_bytes                  # x_aux tile
               + _pad8(c_out * th) * _pad128(c_out * Hs) * in_bytes  # height operator
               + 2 * c_out * _pad8(th) * w_pad * 4)                 # out tile + f32 temps
        if 2 * (per + fixed) <= budget:
            best = th
    if best is None:
        raise ValueError(
            "Up_layer pallas kernel: no spatial tile fits the VMEM budget "
            f"(H={H}, W={W}, Hs={Hs}, c_in={c_in}, c_out={c_out}, "
            f"budget={budget} bytes).")
    return best


def _pick_pool_chunk(HW, c_in, c_out, in_bytes, budget, want_split):
    """Largest flat spatial chunk (multiple of 128 dividing H*W) for pass 1."""
    cands = sorted({c for c in range(128, HW + 1, 128) if HW % c == 0} | {HW})
    fits = [c for c in cands
            if 2 * _pad8(c_in) * c * in_bytes + 2 * _pad8(c_out) * c * 4 <= budget]
    if not fits:
        raise ValueError("Up_layer pallas kernel: pooling tile does not fit VMEM.")
    chunk = fits[-1]
    if want_split and chunk == HW and len(fits) > 1:
        # N == 1: split the pooling grid so both v7x TensorCores get work.
        chunk = fits[-2]
    return chunk


# --------------------------------------------------------------------------- #
# pass 1: per-tile partial sums of relu(bn(conv1x1(x_aux)))
# --------------------------------------------------------------------------- #
def _pool_kernel(xaux_ref, w1_ref, shift_ref, psum_ref):
    # 1x1 conv (BN scale pre-folded into w1) on a flat (c_in, chunk) tile,
    # folded BN shift + ReLU, then a lane reduction -> partial pooled sum.
    y = jnp.dot(w1_ref[...], xaux_ref[...], preferred_element_type=jnp.float32)
    y = jnp.maximum(y + shift_ref[...], 0.0)                        # (c_out, chunk)
    psum_ref[...] = jnp.sum(y, axis=1, keepdims=True)               # (c_out, 1)


# --------------------------------------------------------------------------- #
# pass 2: out = bilinear_upsample(x) + relu(bn(conv1x1(x_aux))) * attn
# --------------------------------------------------------------------------- #
def _apply_kernel(xs2_ref, xaux_ref, bh_ref, awt_ref, w1_ref, shift_ref,
                  attn_ref, o_ref):
    c_out, th, w_hi = o_ref.shape
    c_in = xaux_ref.shape[0]

    # --- 1x1 conv (BN scale folded into w1) as an unrolled VPU MAC over c_in.
    # TODO(synk): for large c_in/c_out this should switch to an MXU matmul path.
    y = jnp.zeros((c_out, th, w_hi), jnp.float32)
    for i in range(c_in):
        y = y + w1_ref[i] * xaux_ref[i].astype(jnp.float32)[None, :, :]
    y = jnp.maximum(y + shift_ref[...], 0.0)                        # folded BN + ReLU
    y = y * attn_ref[...]                                           # FCA attention

    # --- separable bilinear upsample: two plain 2-D MXU matmuls -------------
    #   height: block-diag kron(I_C, Ah_rowblock) @ xs2 -> (c_out*th, Ws)
    #   width :                              (...) @ AwT -> (c_out*th, W)
    s = jnp.dot(bh_ref[...], xs2_ref[...], preferred_element_type=jnp.float32)
    x_up = jnp.dot(s.astype(awt_ref.dtype), awt_ref[...],
                   preferred_element_type=jnp.float32)

    # single full-tile store (th % 8 == 0 -> the leading-dim split is free)
    o_ref[...] = (x_up.reshape(c_out, th, w_hi) + y).astype(o_ref.dtype)


# --------------------------------------------------------------------------- #
# wrapper
# --------------------------------------------------------------------------- #
def up_layer(x, x_aux, params, *, matmul_dtype=jnp.bfloat16):
    """x: (N, C_out, Hs, Ws), x_aux: (N, C_in, H, W) — PyTorch NCHW layout.

    matmul_dtype: dtype of the conv / interpolation operands read from HBM
    (bf16 by default; accumulation, BN, attention and the output stay f32)."""
    N, c_out, Hs, Ws = x.shape
    Nb, c_in, H, W = x_aux.shape
    assert Nb == N
    HW = H * W
    out_dtype = x.dtype

    in_bytes = np.dtype(matmul_dtype).itemsize
    budget = _vmem_budget_bytes()

    # ---- parameters: fold eval-mode BatchNorm into the 1x1 conv ------------
    # TODO(synk): BatchNorm is folded in eval mode (running stats); training-
    # mode batch statistics are not reproduced.
    eps = 1e-5
    scale_v = params["bn_gamma"] / jnp.sqrt(params["bn_var"] + eps)
    shift_v = params["bn_beta"] - params["bn_mean"] * scale_v
    w1_eff = (params["conv_w"][:, :, 0, 0] * scale_v[:, None]).astype(jnp.float32)
    wf = params["fca_w"][:, :, 0, 0].astype(jnp.float32)            # (c_out, c_out)
    bf = params["fca_b"].astype(jnp.float32)                        # (c_out,)

    # narrow operands; pure reshapes of NCHW (no transposes)
    xaux_c = x_aux.astype(matmul_dtype)                             # (N, c_in, H, W)
    xaux_flat = xaux_c.reshape(N, c_in, HW)
    xs2 = x.reshape(N, c_out * Hs, Ws).astype(matmul_dtype)         # (N, C*Hs, Ws)

    # ---- pass 1: partial pooled sums (fully parallel grid) -----------------
    chunk = _pick_pool_chunk(HW, c_in, c_out, in_bytes, budget, want_split=(N == 1))
    T1 = HW // chunk
    w1_p1 = w1_eff.astype(matmul_dtype)                             # (c_out, c_in)
    shift_p1 = shift_v.reshape(c_out, 1).astype(jnp.float32)

    psum = pl.pallas_call(
        _pool_kernel,
        out_shape=jax.ShapeDtypeStruct((N, T1, c_out, 1), jnp.float32),
        grid=(N, T1),
        in_specs=[
            pl.BlockSpec((None, c_in, chunk), lambda n, t: (n, 0, t)),
            pl.BlockSpec((c_out, c_in), lambda n, t: (0, 0)),
            pl.BlockSpec((c_out, 1), lambda n, t: (0, 0)),
        ],
        out_specs=pl.BlockSpec((None, None, c_out, 1), lambda n, t: (n, t, 0, 0)),
        compiler_params=pltpu.CompilerParams(
            dimension_semantics=("parallel", "parallel"),
            vmem_limit_bytes=budget),
    )(xaux_flat, w1_p1, shift_p1)

    # tiny FCA epilogue (N x c_out): global pool -> 1x1 conv -> sigmoid.
    # Done in plain JAX so pass 1 stays fully parallel across tiles/cores.
    pool = psum[..., 0].sum(axis=1) / float(HW)                     # (N, c_out)
    attn = jax.nn.sigmoid(pool @ wf.T + bf[None, :])                # (N, c_out)
    attn = attn.reshape(N, c_out, 1, 1).astype(jnp.float32)

    # ---- pass 2: upsample + conv-block * attn, one store per tile ----------
    th = _pick_row_tile(H, W, Hs, Ws, c_in, c_out, in_bytes, budget)
    T = H // th
    awt = jnp.asarray(_width_operator(W, Ws), dtype=matmul_dtype)   # (Ws, W)
    bh = jnp.asarray(_height_operator(H, Hs, c_out, th), dtype=matmul_dtype)
    w1_p2 = w1_eff.T.reshape(c_in, c_out, 1, 1)                     # f32, per-c_in cols
    shift_p2 = shift_v.reshape(c_out, 1, 1).astype(jnp.float32)

    out = pl.pallas_call(
        _apply_kernel,
        out_shape=jax.ShapeDtypeStruct((N, c_out, H, W), out_dtype),
        grid=(N, T),
        in_specs=[
            pl.BlockSpec((None, c_out * Hs, Ws), lambda n, t: (n, 0, 0)),
            pl.BlockSpec((None, c_in, th, W), lambda n, t: (n, 0, t, 0)),
            pl.BlockSpec((c_out * th, c_out * Hs), lambda n, t: (t, 0)),
            pl.BlockSpec((Ws, W), lambda n, t: (0, 0)),
            pl.BlockSpec((c_in, c_out, 1, 1), lambda n, t: (0, 0, 0, 0)),
            pl.BlockSpec((c_out, 1, 1), lambda n, t: (0, 0, 0)),
            pl.BlockSpec((None, c_out, 1, 1), lambda n, t: (n, 0, 0, 0)),
        ],
        out_specs=pl.BlockSpec((None, c_out, th, W), lambda n, t: (n, 0, t, 0)),
        compiler_params=pltpu.CompilerParams(
            dimension_semantics=("parallel", "parallel"),
            vmem_limit_bytes=budget),
    )(xs2, xaux_c, bh, awt, w1_p2, shift_p2, attn)

    return out


# --------------------------------------------------------------------------- #
# pure-JAX reference (identical semantics, NCHW)
# --------------------------------------------------------------------------- #
def reference(x, x_aux, params):
    N, c_out, Hs, Ws = x.shape
    _, c_in, H, W = x_aux.shape
    Ah = jnp.asarray(bilinear_matrix(H, Hs))
    Aw = jnp.asarray(bilinear_matrix(W, Ws))
    xu = jnp.einsum("ph,nchw,qw->ncpq", Ah, x, Aw)
    w1 = params["conv_w"][:, :, 0, 0]
    y = jnp.einsum("oc,nchw->nohw", w1, x_aux)
    eps = 1e-5
    scale = params["bn_gamma"] / jnp.sqrt(params["bn_var"] + eps)
    shift = params["bn_beta"] - params["bn_mean"] * scale
    y = jnp.maximum(y * scale[None, :, None, None] + shift[None, :, None, None], 0.0)
    pool = y.mean(axis=(2, 3))
    wf = params["fca_w"][:, :, 0, 0]
    attn = jax.nn.sigmoid(pool @ wf.T + params["fca_b"][None, :])
    return xu + y * attn[:, :, None, None]


if __name__ == "__main__":
    key = jax.random.PRNGKey(0)
    N, c_in, c_out = 2, 4, 8
    Hs = Ws = 32          # low-res spatial size of x
    H = W = 64            # high-res spatial size of x_aux (2x bilinear upsample)

    k = jax.random.split(key, 8)
    x = jax.random.normal(k[0], (N, c_out, Hs, Ws), jnp.float32)
    x_aux = jax.random.normal(k[1], (N, c_in, H, W), jnp.float32)

    params = dict(
        conv_w=jax.random.normal(k[2], (c_out, c_in, 1, 1), jnp.float32) * 0.3,
        bn_gamma=1.0 + 0.1 * jax.random.normal(k[3], (c_out,), jnp.float32),
        bn_beta=0.1 * jax.random.normal(k[4], (c_out,), jnp.float32),
        bn_mean=0.05 * jax.random.normal(k[5], (c_out,), jnp.float32),
        bn_var=jnp.abs(jax.random.normal(k[6], (c_out,), jnp.float32)) * 0.1 + 0.9,
        fca_w=jax.random.normal(k[7], (c_out, c_out, 1, 1), jnp.float32) * 0.3,
        fca_b=jnp.full((c_out,), 0.01, jnp.float32),
    )

    ref = jax.block_until_ready(reference(x, x_aux, params))

    # f32-operand run: tight correctness check.
    out32 = jax.block_until_ready(up_layer(x, x_aux, params, matmul_dtype=jnp.float32))
    np.testing.assert_allclose(np.asarray(out32), np.asarray(ref),
                               rtol=1e-4, atol=1e-4)

    # default bf16-operand run (v5e/v6e perf default): relaxed tolerance.
    out_bf = jax.block_until_ready(up_layer(x, x_aux, params))
    np.testing.assert_allclose(np.asarray(out_bf), np.asarray(ref),
                               rtol=2e-2, atol=5e-2)

    print("KERNEL_OK")
</pallas_src>

<mosaic_0001>
module attributes {stable_mosaic.version = 11 : i64} {
  func.func @_pool_kernel(%arg0: i32, %arg1: i32, %arg2: memref<1x4x4096xf32, #tpu.memory_space<vmem>>, %arg3: memref<8x4xf32, #tpu.memory_space<vmem>>, %arg4: memref<8x1xf32, #tpu.memory_space<vmem>>, %arg5: memref<1x1x8x1xf32, #tpu.memory_space<vmem>>) attributes {dimension_semantics = [#tpu.dimension_semantics<parallel>, #tpu.dimension_semantics<parallel>], iteration_bounds = array<i64: 2, 1>, scalar_prefetch = 0 : i64, scratch_operands = 0 : i64, tpu.core_type = #tpu.core_type<tc>, window_params = [{transform_indices = @transform_0, window_bounds = array<i64: 1, 4, 4096>}, {pipeline_mode = #tpu.pipeline_mode<synchronous>, transform_indices = @transform_1, window_bounds = array<i64: 8, 4>}, {pipeline_mode = #tpu.pipeline_mode<synchronous>, transform_indices = @transform_2, window_bounds = array<i64: 8, 1>}, {transform_indices = @transform_3, window_bounds = array<i64: 1, 1, 8, 1>}]} {
    %c0 = arith.constant 0 : index
    %c0_0 = arith.constant 0 : index
    %0 = vector.load %arg3[%c0, %c0_0] : memref<8x4xf32, #tpu.memory_space<vmem>>, vector<8x4xf32>
    %c0_1 = arith.constant 0 : index
    %c0_2 = arith.constant 0 : index
    %c0_3 = arith.constant 0 : index
    %1 = vector.load %arg2[%c0_1, %c0_2, %c0_3] : memref<1x4x4096xf32, #tpu.memory_space<vmem>>, vector<1x4x4096xf32>
    %2 = vector.shape_cast %1 : vector<1x4x4096xf32> to vector<4x4096xf32>
    %cst = arith.constant dense<0.000000e+00> : vector<8x4096xf32>
    %3 = tpu.matmul %0, %2, %cst {dimension_numbers = #tpu.dot_dimension_numbers<[1], [0], [0], [1], [0, 0, 1, 1], [], []>} : vector<8x4xf32>, vector<4x4096xf32>, vector<8x4096xf32> -> vector<8x4096xf32>
    %c0_4 = arith.constant 0 : index
    %c0_5 = arith.constant 0 : index
    %4 = vector.load %arg4[%c0_4, %c0_5] : memref<8x1xf32, #tpu.memory_space<vmem>>, vector<8x1xf32>
    %5 = vector.broadcast %4 : vector<8x1xf32> to vector<8x4096xf32>
    %6 = arith.addf %3, %5 : vector<8x4096xf32>
    %cst_6 = arith.constant 0.000000e+00 : f32
    %7 = vector.broadcast %cst_6 : f32 to vector<8x4096xf32>
    %8 = arith.maximumf %6, %7 : vector<8x4096xf32>
    %cst_7 = arith.constant dense<0.000000e+00> : vector<8xf32>
    %9 = vector.multi_reduction <add>, %8, %cst_7 [1] : vector<8x4096xf32> to vector<8xf32>
    %10 = vector.shape_cast %9 : vector<8xf32> to vector<8x1xf32>
    %c0_8 = arith.constant 0 : index
    %c0_9 = arith.constant 0 : index
    %c0_10 = arith.constant 0 : index
    %c0_11 = arith.constant 0 : index
    %11 = vector.load %arg5[%c0_8, %c0_9, %c0_10, %c0_11] : memref<1x1x8x1xf32, #tpu.memory_space<vmem>>, vector<1x1x8x1xf32>
    %12 = vector.shape_cast %11 : vector<1x1x8x1xf32> to vector<8x1xf32>
    %13 = vector.shape_cast %10 : vector<8x1xf32> to vector<1x1x8x1xf32>
    tpu.vector_store %arg5[%c0_8, %c0_9, %c0_10, %c0_11], %13 {strides = array<i32>} : memref<1x1x8x1xf32, #tpu.memory_space<vmem>>, vector<1x1x8x1xf32>,
    return
  }
  func.func @transform_0(%arg0: i32, %arg1: i32) -> (i32, i32, i32) {
    %c0_i32 = arith.constant 0 : i32
    %c0_i32_0 = arith.constant 0 : i32
    return %arg0, %c0_i32, %arg1 : i32, i32, i32
  }
  func.func @transform_1(%arg0: i32, %arg1: i32) -> (i32, i32) {
    %c0_i32 = arith.constant 0 : i32
    %c0_i32_0 = arith.constant 0 : i32
    %c0_i32_1 = arith.constant 0 : i32
    return %c0_i32, %c0_i32_0 : i32, i32
  }
  func.func @transform_2(%arg0: i32, %arg1: i32) -> (i32, i32) {
    %c0_i32 = arith.constant 0 : i32
    %c0_i32_0 = arith.constant 0 : i32
    %c0_i32_1 = arith.constant 0 : i32
    return %c0_i32, %c0_i32_0 : i32, i32
  }
  func.func @transform_3(%arg0: i32, %arg1: i32) -> (i32, i32, i32, i32) {
    %c0_i32 = arith.constant 0 : i32
    %c0_i32_0 = arith.constant 0 : i32
    %c0_i32_1 = arith.constant 0 : i32
    return %arg0, %arg1, %c0_i32, %c0_i32_0 : i32, i32, i32, i32
  }
}

</mosaic_0001>

<llo_original>
// kernel: tpu_custom_call.1
$region0: #{tpu_custom_call.1}
  #allocation0 [shape = 'u32[]', space=smem, size = 0x4, offset = 0x4, fixed_abs, tag = 'smem constant byte address 0x4 - core index']
  #allocation1 [shape = 'u32[72,128]{1,0:T(1,128)}', space=vmem, size = 0x9000, scoped, tag = 'internal scratch']
  %s0 = inlined_call_operand.hbm [shape: f32[2,4,4096], index: 0, kind: input, shape index: {}]
  %s1 = inlined_call_operand.vmem [shape: f32[8,4], index: 1, kind: input, shape index: {}]
  %s2 = inlined_call_operand.vmem [shape: f32[8,1], index: 2, kind: input, shape index: {}]
  %s3 = inlined_call_operand.vmem [shape: f32[2,1,8,1], index: 3, kind: output, shape index: {}]
  %s4 = sld [smem:[#allocation0]]
  $region49: #{tpu_custom_call.1} parent=0
    _
  %s6 = ssub.s32 1, %s4
  %s7 = scalar_select 0, %s6, %s4
  $region1: #{tpu_custom_call.1} parent=0
    #allocation2 [shape = 'u8[131072]{0}', space=vmem, size = 0x20000, scoped, tag = 'input window, operand 0']
    #allocation3 [shape = 's32[2]{0}', space=sflag, size = 0x8, scoped, tag = 'scoped memory for tpu_custom_call.1']
    %8 = vsyncpa [#allocation3], 0
    %s9 = scalar_lea.sflag [#allocation3], 1
    %10 = vsyncpa %s9, 0
    loop: start=0, step=1, limit=4
    $region2: #{tpu_custom_call.1} parent=1 // loop_pre_header
      _
    $region3: #{tpu_custom_call.1} parent=1 // loop_header
      %s12 = sphi 0, %s16
      %p13 = scmp.ge.s32.totalorder %s12, 4
      %s19 = sphi 0, %s31
      %s20 = sphi 0, %s27
      %s21 = sphi 0, %s19
      %s22 = sphi 0, %s20
      %s23 = sphi 0, %s21
      %s24 = sphi 0, %s22
      %s36 = sphi 0, %s38
      %s39 = sphi 0, %s36
      %s40 = sphi 0, %s39
      %s56 = sphi 0, %s40
      %s60 = sphi 0, %s60
      %s62 = sphi 0, %s60
      %s63 = sphi 0, %s62
      %s77 = sphi 0, %s63
      %s81 = sphi 0, %s81
      %s83 = sphi 0, %s81
      %s84 = sphi 0, %s83
      %s98 = sphi 0, %s84
      %s106 = sphi 0, %s108
      %s109 = sphi 0, %s106
      %s110 = sphi 0, %s109
      %s126 = sphi 0, %s110
    $region4: #{tpu_custom_call.1} parent=1 // loop_header_branch
      %15 = sbr.rel (%p13) target = $region8
    $region5: #{tpu_custom_call.1} parent=1 // loop_body
      %s17 = ssub.s32 %s12, 1
      %s18 = ssub.s32 %s12, 2
      %s25 = sadd.s32 1, %s20
      %p26 = scmp.ge.s32.totalorder %s25, 1
      %s27 = scalar_select %p26, 0, %s25
      %s28 = sadd.s32 1, %s19
      %s29 = scalar_select %p26, %s28, %s19
      %p30 = scmp.ge.s32.totalorder %s29, 2
      %s31 = scalar_select %p30, 0, %s29
      %s32 = ssub.s32 %s19, %s31
      %s33 = ssub.s32 %s20, %s27
      %s34 = sor.u32 %s32, %s33
      %p35 = scmp.eq.s32.totalorder %s34, 0
      %s37 = sadd.s32 %s36, 1
      %s38 = scalar_select %p35, %s36, %s37
      %p41 = pneg %p35
      %p42 = scmp.eq.s32.totalorder %s12, 1
      %p43 = por %p41, %p42
      %p44 = scmp.ne.s32.totalorder %s36, %s39
      %p45 = scmp.eq.s32.totalorder %s12, 0
      %p46 = por %p44, %p45
      %p47 = scmp.ne.s32.totalorder %s36, %s39
      %p48 = scmp.eq.s32.totalorder %s17, 1
      %p49 = por %p47, %p48
      %p50 = scmp.ne.s32.totalorder %s39, %s40
      %p51 = scmp.eq.s32.totalorder %s17, 0
      %p52 = por %p50, %p51
      %p53 = scmp.ne.s32.totalorder %s39, %s40
      %p54 = scmp.eq.s32.totalorder %s18, 1
      %p55 = por %p53, %p54
      %p57 = scmp.ne.s32.totalorder %s40, %s56
      %p58 = scmp.eq.s32.totalorder %s18, 0
      %p59 = por %p57, %p58
      %s61 = sadd.s32 %s60, 1
      %p64 = scmp.eq.s32.totalorder %s12, 1
      %p65 = scmp.ne.s32.totalorder %s60, %s62
      %p66 = scmp.eq.s32.totalorder %s12, 0
      %p67 = por %p65, %p66
      %p68 = scmp.ne.s32.totalorder %s60, %s62
      %p69 = scmp.eq.s32.totalorder %s17, 1
      %p70 = por %p68, %p69
      %p71 = scmp.ne.s32.totalorder %s62, %s63
      %p72 = scmp.eq.s32.totalorder %s17, 0
      %p73 = por %p71, %p72
      %p74 = scmp.ne.s32.totalorder %s62, %s63
      %p75 = scmp.eq.s32.totalorder %s18, 1
      %p76 = por %p74, %p75
      %p78 = scmp.ne.s32.totalorder %s63, %s77
      %p79 = scmp.eq.s32.totalorder %s18, 0
      %p80 = por %p78, %p79
      %s82 = sadd.s32 %s81, 1
      %p85 = scmp.eq.s32.totalorder %s12, 1
      %p86 = scmp.ne.s32.totalorder %s81, %s83
      %p87 = scmp.eq.s32.totalorder %s12, 0
      %p88 = por %p86, %p87
      %p89 = scmp.ne.s32.totalorder %s81, %s83
      %p90 = scmp.eq.s32.totalorder %s17, 1
      %p91 = por %p89, %p90
      %p92 = scmp.ne.s32.totalorder %s83, %s84
      %p93 = scmp.eq.s32.totalorder %s17, 0
      %p94 = por %p92, %p93
      %p95 = scmp.ne.s32.totalorder %s83, %s84
      %p96 = scmp.eq.s32.totalorder %s18, 1
      %p97 = por %p95, %p96
      %p99 = scmp.ne.s32.totalorder %s84, %s98
      %p100 = scmp.eq.s32.totalorder %s18, 0
      %p101 = por %p99, %p100
      %s102 = ssub.s32 %s19, %s31
      %s103 = ssub.s32 %s20, %s27
      %s104 = sor.u32 %s102, %s103
      %p105 = scmp.eq.s32.totalorder %s104, 0
      %s107 = sadd.s32 %s106, 1
      %s108 = scalar_select %p105, %s106, %s107
      %p111 = pneg %p105
      %p112 = scmp.eq.s32.totalorder %s12, 1
      %p113 = por %p111, %p112
      %p114 = scmp.ne.s32.totalorder %s106, %s109
      %p115 = scmp.eq.s32.totalorder %s12, 0
      %p116 = por %p114, %p115
      %p117 = scmp.ne.s32.totalorder %s106, %s109
      %p118 = scmp.eq.s32.totalorder %s17, 1
      %p119 = por %p117, %p118
      %p120 = scmp.ne.s32.totalorder %s109, %s110
      %p121 = scmp.eq.s32.totalorder %s17, 0
      %p122 = por %p120, %p121
      %p123 = scmp.ne.s32.totalorder %s109, %s110
      %p124 = scmp.eq.s32.totalorder %s18, 1
      %p125 = por %p123, %p124
      %p127 = scmp.ne.s32.totalorder %s110, %s126
      %p128 = scmp.eq.s32.totalorder %s18, 0
      %p129 = por %p127, %p128
      %p130 = scmp.le.s32.totalorder 1, %s12
      %p131 = scmp.lt.s32.totalorder %s12, 3
      %p132 = pnand %p130, %p131
      %p133 = pneg %p132
      // Predicated region
      $region9: #{tpu_custom_call.1} parent=5 // pred_check
        _
      $region10: #{tpu_custom_call.1} parent=5 // pred_check_branch
        %135 = sbr.rel (%p132) target = $region12
      $region11: #{tpu_custom_call.1} parent=5 // pred_region
        %s136 = ssub.s32 %s12, 1
        // Predicated region
        $region13: #{tpu_custom_call.1} parent=11 // pred_check
          %p137 = pneg %p73
        $region14: #{tpu_custom_call.1} parent=11 // pred_check_branch
          %139 = sbr.rel (%p137) target = $region16
        $region15: #{tpu_custom_call.1} parent=11 // pred_region
          _
        $region16: #{tpu_custom_call.1} parent=11 // pred_fallthru
          _
        // Predicated region
        $region17: #{tpu_custom_call.1} parent=11 // pred_check
          %p140 = pneg %p94
        $region18: #{tpu_custom_call.1} parent=11 // pred_check_branch
          %142 = sbr.rel (%p140) target = $region20
        $region19: #{tpu_custom_call.1} parent=11 // pred_region
          _
        $region20: #{tpu_custom_call.1} parent=11 // pred_fallthru
          _
      $region12: #{tpu_custom_call.1} parent=5 // pred_fallthru
        _
      %p143 = scmp.lt.s32.totalorder %s12, 2
      // Predicated region
      $region21: #{tpu_custom_call.1} parent=5 // pred_check
        %p144 = pneg %p143
      $region22: #{tpu_custom_call.1} parent=5 // pred_check_branch
        %146 = sbr.rel (%p144) target = $region24
      $region23: #{tpu_custom_call.1} parent=5 // pred_region
        // Predicated region
        $region25: #{tpu_custom_call.1} parent=23 // pred_check
          %p147 = pneg %p46
        $region26: #{tpu_custom_call.1} parent=23 // pred_check_branch
          %149 = sbr.rel (%p147) target = $region28
        $region27: #{tpu_custom_call.1} parent=23 // pred_region
          %s150 = sand.u32 %s36, 1
          %s151 = scalar_lea.sflag [#allocation3], %s150
          %s152 = sand.u32 %s36, 1
          %s153 = smul.addr %s152, 128
          %s154 = scalar_lea.vmem [#allocation2], %s153
          %s155 = smul.u32 32, %s20
          %157 = vsyncadd %s151, 0
          %s158 = smul.addr %s19, 32
          %s159 = sadd.s32 %s155, %s158
          %s160 = smul.addr %s159, 4
          %s161 = scalar_lea.hbm %s0, %s160
          %s163 = sshll.u32 %s161, 4
          %s164 = int_to_ptr.hbm [resolvable:$true] %s163
          %s165 = sshll.u32 %s154, 4
          %s166 = int_to_ptr.vmem [resolvable:$true] %s165
          %168 = dma.hbm_to_vmem [thread:$0]  %s164, 2048, %s166, %s151
        $region28: #{tpu_custom_call.1} parent=23 // pred_fallthru
          _
      $region24: #{tpu_custom_call.1} parent=5 // pred_fallthru
        _
      %p169 = scmp.le.s32.totalorder 1, %s12
      %p170 = scmp.lt.s32.totalorder %s12, 3
      %p171 = pnand %p169, %p170
      %p172 = pneg %p171
      // Predicated region
      $region29: #{tpu_custom_call.1} parent=5 // pred_check
        _
      $region30: #{tpu_custom_call.1} parent=5 // pred_check_branch
        %174 = sbr.rel (%p171) target = $region32
      $region31: #{tpu_custom_call.1} parent=5 // pred_region
        %s175 = ssub.s32 %s12, 1
        %s176 = sand.u32 %s39, 1
        %s177 = scalar_lea.sflag [#allocation3], %s176
        %s178 = sand.u32 %s39, 1
        %s179 = smul.addr %s178, 128
        %s180 = scalar_lea.vmem [#allocation2], %s179
        // Predicated region
        $region33: #{tpu_custom_call.1} parent=31 // pred_check
          %p181 = pneg %p52
        $region34: #{tpu_custom_call.1} parent=31 // pred_check_branch
          %183 = sbr.rel (%p181) target = $region36
        $region35: #{tpu_custom_call.1} parent=31 // pred_region
          %185 = dma.done %s177, 2048
        $region36: #{tpu_custom_call.1} parent=31 // pred_fallthru
          _
        %s186 = sand.u32 %s39, 1
        %s187 = scalar_lea.sflag [#allocation3], %s186
        %s188 = sand.u32 %s39, 1
        %s189 = smul.addr %s188, 128
        %s190 = scalar_lea.vmem [#allocation2], %s189
        %p191 = pneg %p52
        %p192 = pneg %p49
        %p193 = pneg %p73
        %p194 = pneg %p70
        %p195 = pneg %p94
        %p196 = pneg %p91
        %p197 = pneg %p122
        %p198 = pneg %p119
        %p199 = scmp.lt.s32.totalorder %s21, 1
        %s200 = scalar_select %p199, %s21, 1
        %p201 = scmp.lt.s32.totalorder %s22, 0
        %s202 = scalar_select %p201, %s22, 0
        %s203 = sadd.s32 %s202, %s200
        %s204 = smul.addr %s203, 8
        %s205 = scalar_lea.vmem %s3, %s204
        %s206 = smul.u32 32, %s22
        %p207 = scmp.lt.s32.totalorder %s21, 1
        %s208 = scalar_select %p207, %s21, 1
        %p209 = scmp.lt.s32.totalorder %s22, 0
        %s210 = scalar_select %p209, %s22, 0
        %s211 = sadd.s32 %s210, %s208
        %s212 = smul.addr %s211, 8
        %s213 = scalar_lea.vmem %s3, %s212
        %v214 = vld [vmem:[%s1] sm:$0xff]
        %v215 = vld [vmem:[%s180] sm:$0xff]
        %v216 = vld [vmem:[%s180 + $0x8] sm:$0xff]
        %v217 = vld [vmem:[%s180 + $0x10] sm:$0xff]
        %v218 = vld [vmem:[%s180 + $0x18] sm:$0xff]
        %v219 = vld [vmem:[%s180 + $0x20] sm:$0xff]
        %v220 = vld [vmem:[%s180 + $0x28] sm:$0xff]
        %v221 = vld [vmem:[%s180 + $0x30] sm:$0xff]
        %v222 = vld [vmem:[%s180 + $0x38] sm:$0xff]
        %v223 = vld [vmem:[%s180 + $0x40] sm:$0xff]
        %v224 = vld [vmem:[%s180 + $0x48] sm:$0xff]
        %v225 = vld [vmem:[%s180 + $0x50] sm:$0xff]
        %v226 = vld [vmem:[%s180 + $0x58] sm:$0xff]
        %v227 = vld [vmem:[%s180 + $0x60] sm:$0xff]
        %v228 = vld [vmem:[%s180 + $0x68] sm:$0xff]
        %v229 = vld [vmem:[%s180 + $0x70] sm:$0xff]
        %v230 = vld [vmem:[%s180 + $0x78] sm:$0xff]
        %v231 = vld [vmem:[%s2] sm:$0xff]
        %233 = vset.pattern.permute.xlu0 0
        %234 = vperm.xlu0 %233, %v231
        %v235 = vpop.permute.xlu0 %234
        %253 = vst [vmem:[#allocation1] ss:$2 sm:$0xff] %v215
        %s254 = scalar_lea.vmem [#allocation1], 16
        %255 = vst [vmem:[%s254] ss:$2 sm:$0xff] %v216
        %s256 = scalar_lea.vmem [#allocation1], 32
        %257 = vst [vmem:[%s256] ss:$2 sm:$0xff] %v217
        %s258 = scalar_lea.vmem [#allocation1], 48
        %259 = vst [vmem:[%s258] ss:$2 sm:$0xff] %v218
        %v260 = vld.sshfl [vmem:[#allocation1] sm:$0xff pattern:$0x75316420]
        %v261 = vld.sshfl [vmem:[#allocation1 + $0x8] sm:$0xff pattern:$0x75316420]
        %v262 = vld.sshfl [vmem:[#allocation1 + $0x10] sm:$0xff pattern:$0x75316420]
        %v263 = vld.sshfl [vmem:[#allocation1 + $0x18] sm:$0xff pattern:$0x75316420]
        %v264 = vld.sshfl [vmem:[#allocation1 + $0x20] sm:$0xff pattern:$0x75316420]
        %v265 = vld.sshfl [vmem:[#allocation1 + $0x28] sm:$0xff pattern:$0x75316420]
        %v266 = vld.sshfl [vmem:[#allocation1 + $0x30] sm:$0xff pattern:$0x75316420]
        %v267 = vld.sshfl [vmem:[#allocation1 + $0x38] sm:$0xff pattern:$0x75316420]
        %268 = vst [vmem:[#allocation1] ss:$2 sm:$0xff] %v219
        %269 = vst [vmem:[%s254] ss:$2 sm:$0xff] %v220
        %270 = vst [vmem:[%s256] ss:$2 sm:$0xff] %v221
        %271 = vst [vmem:[%s258] ss:$2 sm:$0xff] %v222
        %v272 = vld.sshfl [vmem:[#allocation1] sm:$0xff pattern:$0x75316420]
        %v273 = vld.sshfl [vmem:[#allocation1 + $0x8] sm:$0xff pattern:$0x75316420]
        %v274 = vld.sshfl [vmem:[#allocation1 + $0x10] sm:$0xff pattern:$0x75316420]
        %v275 = vld.sshfl [vmem:[#allocation1 + $0x18] sm:$0xff pattern:$0x75316420]
        %v276 = vld.sshfl [vmem:[#allocation1 + $0x20] sm:$0xff pattern:$0x75316420]
        %v277 = vld.sshfl [vmem:[#allocation1 + $0x28] sm:$0xff pattern:$0x75316420]
        %v278 = vld.sshfl [vmem:[#allocation1 + $0x30] sm:$0xff pattern:$0x75316420]
        %v279 = vld.sshfl [vmem:[#allocation1 + $0x38] sm:$0xff pattern:$0x75316420]
        %280 = vst [vmem:[#allocation1] ss:$2 sm:$0xff] %v223
        %281 = vst [vmem:[%s254] ss:$2 sm:$0xff] %v224
        %282 = vst [vmem:[%s256] ss:$2 sm:$0xff] %v225
        %283 = vst [vmem:[%s258] ss:$2 sm:$0xff] %v226
        %v284 = vld.sshfl [vmem:[#allocation1] sm:$0xff pattern:$0x75316420]
        %v285 = vld.sshfl [vmem:[#allocation1 + $0x8] sm:$0xff pattern:$0x75316420]
        %v286 = vld.sshfl [vmem:[#allocation1 + $0x10] sm:$0xff pattern:$0x75316420]
        %v287 = vld.sshfl [vmem:[#allocation1 + $0x18] sm:$0xff pattern:$0x75316420]
        %v288 = vld.sshfl [vmem:[#allocation1 + $0x20] sm:$0xff pattern:$0x75316420]
        %v289 = vld.sshfl [vmem:[#allocation1 + $0x28] sm:$0xff pattern:$0x75316420]
        %v290 = vld.sshfl [vmem:[#allocation1 + $0x30] sm:$0xff pattern:$0x75316420]
        %v291 = vld.sshfl [vmem:[#allocation1 + $0x38] sm:$0xff pattern:$0x75316420]
        %292 = vst [vmem:[#allocation1] ss:$2 sm:$0xff] %v227
        %293 = vst [vmem:[%s254] ss:$2 sm:$0xff] %v228
        %294 = vst [vmem:[%s256] ss:$2 sm:$0xff] %v229
        %295 = vst [vmem:[%s258] ss:$2 sm:$0xff] %v230
        %v296 = vld.sshfl [vmem:[#allocation1] sm:$0xff pattern:$0x75316420]
        %v297 = vld.sshfl [vmem:[#allocation1 + $0x8] sm:$0xff pattern:$0x75316420]
        %v298 = vld.sshfl [vmem:[#allocation1 + $0x10] sm:$0xff pattern:$0x75316420]
        %v299 = vld.sshfl [vmem:[#allocation1 + $0x18] sm:$0xff pattern:$0x75316420]
        %v300 = vld.sshfl [vmem:[#allocation1 + $0x20] sm:$0xff pattern:$0x75316420]
        %v301 = vld.sshfl [vmem:[#allocation1 + $0x28] sm:$0xff pattern:$0x75316420]
        %v302 = vld.sshfl [vmem:[#allocation1 + $0x30] sm:$0xff pattern:$0x75316420]
        %v303 = vld.sshfl [vmem:[#allocation1 + $0x38] sm:$0xff pattern:$0x75316420]
        %vm304 = vcmask 31744
        %v306 = vsel %vm304, %v214, 0
        %vm308 = vcmask 1043456
        %v309 = vsel %vm308, %v260, 0
        %v311 = vsel %vm308, %v261, 0
        %v313 = vsel %vm308, %v262, 0
        %v315 = vsel %vm308, %v263, 0
        %v317 = vsel %vm308, %v264, 0
        %v319 = vsel %vm308, %v265, 0
        %v321 = vsel %vm308, %v266, 0
        %v323 = vsel %vm308, %v267, 0
        %v325 = vsel %vm308, %v272, 0
        %v327 = vsel %vm308, %v273, 0
        %v329 = vsel %vm308, %v274, 0
        %v331 = vsel %vm308, %v275, 0
        %v333 = vsel %vm308, %v276, 0
        %v335 = vsel %vm308, %v277, 0
        %v337 = vsel %vm308, %v278, 0
        %v339 = vsel %vm308, %v279, 0
        %v341 = vsel %vm308, %v284, 0
        %v343 = vsel %vm308, %v285, 0
        %v345 = vsel %vm308, %v286, 0
        %v347 = vsel %vm308, %v287, 0
        %v349 = vsel %vm308, %v288, 0
        %v351 = vsel %vm308, %v289, 0
        %v353 = vsel %vm308, %v290, 0
        %v355 = vsel %vm308, %v291, 0
        %v357 = vsel %vm308, %v296, 0
        %v359 = vsel %vm308, %v297, 0
        %v361 = vsel %vm308, %v298, 0
        %v363 = vsel %vm308, %v299, 0
        %v365 = vsel %vm308, %v300, 0
        %v367 = vsel %vm308, %v301, 0
        %v369 = vsel %vm308, %v302, 0
        %v371 = vsel %vm308, %v303, 0
        %373 = vmatpush.msra.mxu0 0.0
        %374 = vmatpush.msra.mxu0 0.0
        %375 = vmatpush.msra.mxu0 0.0
        %376 = vmatpush.msra.mxu0 0.0
        %377 = vmatpush.msra.mxu0 0.0
        %378 = vmatpush.msra.mxu0 0.0
        %379 = vmatpush.msra.mxu0 0.0
        %380 = vmatpush.msra.mxu0 0.0
        %381 = vmatpush.msra.mxu0 0.0
        %382 = vmatpush.msra.mxu0 0.0
        %383 = vmatpush.msra.mxu0 0.0
        %384 = vmatpush.msra.mxu0 0.0
        %385 = vmatpush.msra.mxu0 0.0
        %386 = vmatpush.msra.mxu0 0.0
        %387 = vmatpush.msra.mxu0 0.0
        %388 = vmatpush.msra.mxu0 %v309
        %389 = vmatmul.f32.gmra.mxu0 %v306
        %v390 = vpop.f32.mrf.mxu0
        %v391 = vadd.f32 %v235, %v390
        %392 = vdwg.mxu0
        %393 = vmatpush.msra.mxu0 0.0
        %394 = vmatpush.msra.mxu0 0.0
        %395 = vmatpush.msra.mxu0 0.0
        %396 = vmatpush.msra.mxu0 0.0
        %397 = vmatpush.msra.mxu0 0.0
        %398 = vmatpush.msra.mxu0 0.0
        %399 = vmatpush.msra.mxu0 0.0
        %400 = vmatpush.msra.mxu0 0.0
        %401 = vmatpush.msra.mxu0 0.0
        %402 = vmatpush.msra.mxu0 0.0
        %403 = vmatpush.msra.mxu0 0.0
        %404 = vmatpush.msra.mxu0 0.0
        %405 = vmatpush.msra.mxu0 0.0
        %406 = vmatpush.msra.mxu0 0.0
        %407 = vmatpush.msra.mxu0 0.0
        %408 = vmatpush.msra.mxu0 %v311
        %409 = vmatmul.f32.gmra.mxu0 %v306
        %v410 = vpop.f32.mrf.mxu0
        %v411 = vadd.f32 %v235, %v410
        %412 = vdwg.mxu0
        %413 = vmatpush.msra.mxu0 0.0
        %414 = vmatpush.msra.mxu0 0.0
        %415 = vmatpush.msra.mxu0 0.0
        %416 = vmatpush.msra.mxu0 0.0
        %417 = vmatpush.msra.mxu0 0.0
        %418 = vmatpush.msra.mxu0 0.0
        %419 = vmatpush.msra.mxu0 0.0
        %420 = vmatpush.msra.mxu0 0.0
        %421 = vmatpush.msra.mxu0 0.0
        %422 = vmatpush.msra.mxu0 0.0
        %423 = vmatpush.msra.mxu0 0.0
        %424 = vmatpush.msra.mxu0 0.0
        %425 = vmatpush.msra.mxu0 0.0
        %426 = vmatpush.msra.mxu0 0.0
        %427 = vmatpush.msra.mxu0 0.0
        %428 = vmatpush.msra.mxu0 %v313
        %429 = vmatmul.f32.gmra.mxu0 %v306
        %v430 = vpop.f32.mrf.mxu0
        %v431 = vadd.f32 %v235, %v430
        %432 = vdwg.mxu0
        %433 = vmatpush.msra.mxu0 0.0
        %434 = vmatpush.msra.mxu0 0.0
        %435 = vmatpush.msra.mxu0 0.0
        %436 = vmatpush.msra.mxu0 0.0
        %437 = vmatpush.msra.mxu0 0.0
        %438 = vmatpush.msra.mxu0 0.0
        %439 = vmatpush.msra.mxu0 0.0
        %440 = vmatpush.msra.mxu0 0.0
        %441 = vmatpush.msra.mxu0 0.0
        %442 = vmatpush.msra.mxu0 0.0
        %443 = vmatpush.msra.mxu0 0.0
        %444 = vmatpush.msra.mxu0 0.0
        %445 = vmatpush.msra.mxu0 0.0
        %446 = vmatpush.msra.mxu0 0.0
        %447 = vmatpush.msra.mxu0 0.0
        %448 = vmatpush.msra.mxu0 %v315
        %449 = vmatmul.f32.gmra.mxu0 %v306
        %v450 = vpop.f32.mrf.mxu0
        %v451 = vadd.f32 %v235, %v450
        %452 = vdwg.mxu0
        %453 = vmatpush.msra.mxu0 0.0
        %454 = vmatpush.msra.mxu0 0.0
        %455 = vmatpush.msra.mxu0 0.0
        %456 = vmatpush.msra.mxu0 0.0
        %457 = vmatpush.msra.mxu0 0.0
        %458 = vmatpush.msra.mxu0 0.0
        %459 = vmatpush.msra.mxu0 0.0
        %460 = vmatpush.msra.mxu0 0.0
        %461 = vmatpush.msra.mxu0 0.0
        %462 = vmatpush.msra.mxu0 0.0
        %463 = vmatpush.msra.mxu0 0.0
        %464 = vmatpush.msra.mxu0 0.0
        %465 = vmatpush.msra.mxu0 0.0
        %466 = vmatpush.msra.mxu0 0.0
        %467 = vmatpush.msra.mxu0 0.0
        %468 = vmatpush.msra.mxu0 %v317
        %469 = vmatmul.f32.gmra.mxu0 %v306
        %v470 = vpop.f32.mrf.mxu0
        %v471 = vadd.f32 %v235, %v470
        %472 = vdwg.mxu0
        %473 = vmatpush.msra.mxu0 0.0
        %474 = vmatpush.msra.mxu0 0.0
        %475 = vmatpush.msra.mxu0 0.0
        %476 = vmatpush.msra.mxu0 0.0
        %477 = vmatpush.msra.mxu0 0.0
        %478 = vmatpush.msra.mxu0 0.0
        %479 = vmatpush.msra.mxu0 0.0
        %480 = vmatpush.msra.mxu0 0.0
        %481 = vmatpush.msra.mxu0 0.0
        %482 = vmatpush.msra.mxu0 0.0
        %483 = vmatpush.msra.mxu0 0.0
        %484 = vmatpush.msra.mxu0 0.0
        %485 = vmatpush.msra.mxu0 0.0
        %486 = vmatpush.msra.mxu0 0.0
        %487 = vmatpush.msra.mxu0 0.0
        %488 = vmatpush.msra.mxu0 %v319
        %489 = vmatmul.f32.gmra.mxu0 %v306
        %v490 = vpop.f32.mrf.mxu0
        %v491 = vadd.f32 %v235, %v490
        %492 = vdwg.mxu0
        %493 = vmatpush.msra.mxu0 0.0
        %494 = vmatpush.msra.mxu0 0.0
        %495 = vmatpush.msra.mxu0 0.0
        %496 = vmatpush.msra.mxu0 0.0
        %497 = vmatpush.msra.mxu0 0.0
        %498 = vmatpush.msra.mxu0 0.0
        %499 = vmatpush.msra.mxu0 0.0
        %500 = vmatpush.msra.mxu0 0.0
        %501 = vmatpush.msra.mxu0 0.0
        %502 = vmatpush.msra.mxu0 0.0
        %503 = vmatpush.msra.mxu0 0.0
        %504 = vmatpush.msra.mxu0 0.0
        %505 = vmatpush.msra.mxu0 0.0
        %506 = vmatpush.msra.mxu0 0.0
        %507 = vmatpush.msra.mxu0 0.0
        %508 = vmatpush.msra.mxu0 %v321
        %509 = vmatmul.f32.gmra.mxu0 %v306
        %v510 = vpop.f32.mrf.mxu0
        %v511 = vadd.f32 %v235, %v510
        %512 = vdwg.mxu0
        %513 = vmatpush.msra.mxu0 0.0
        %514 = vmatpush.msra.mxu0 0.0
        %515 = vmatpush.msra.mxu0 0.0
        %516 = vmatpush.msra.mxu0 0.0
        %517 = vmatpush.msra.mxu0 0.0
        %518 = vmatpush.msra.mxu0 0.0
        %519 = vmatpush.msra.mxu0 0.0
        %520 = vmatpush.msra.mxu0 0.0
        %521 = vmatpush.msra.mxu0 0.0
        %522 = vmatpush.msra.mxu0 0.0
        %523 = vmatpush.msra.mxu0 0.0
        %524 = vmatpush.msra.mxu0 0.0
        %525 = vmatpush.msra.mxu0 0.0
        %526 = vmatpush.msra.mxu0 0.0
        %527 = vmatpush.msra.mxu0 0.0
        %528 = vmatpush.msra.mxu0 %v323
        %529 = vmatmul.f32.gmra.mxu0 %v306
        %v530 = vpop.f32.mrf.mxu0
        %v531 = vadd.f32 %v235, %v530
        %532 = vdwg.mxu0
        %533 = vmatpush.msra.mxu0 0.0
        %534 = vmatpush.msra.mxu0 0.0
        %535 = vmatpush.msra.mxu0 0.0
        %536 = vmatpush.msra.mxu0 0.0
        %537 = vmatpush.msra.mxu0 0.0
        %538 = vmatpush.msra.mxu0 0.0
        %539 = vmatpush.msra.mxu0 0.0
        %540 = vmatpush.msra.mxu0 0.0
        %541 = vmatpush.msra.mxu0 0.0
        %542 = vmatpush.msra.mxu0 0.0
        %543 = vmatpush.msra.mxu0 0.0
        %544 = vmatpush.msra.mxu0 0.0
        %545 = vmatpush.msra.mxu0 0.0
        %546 = vmatpush.msra.mxu0 0.0
        %547 = vmatpush.msra.mxu0 0.0
        %548 = vmatpush.msra.mxu0 %v325
        %549 = vmatmul.f32.gmra.mxu0 %v306
        %v550 = vpop.f32.mrf.mxu0
        %v551 = vadd.f32 %v235, %v550
        %552 = vdwg.mxu0
        %553 = vmatpush.msra.mxu0 0.0
        %554 = vmatpush.msra.mxu0 0.0
        %555 = vmatpush.msra.mxu0 0.0
        %556 = vmatpush.msra.mxu0 0.0
        %557 = vmatpush.msra.mxu0 0.0
        %558 = vmatpush.msra.mxu0 0.0
        %559 = vmatpush.msra.mxu0 0.0
        %560 = vmatpush.msra.mxu0 0.0
        %561 = vmatpush.msra.mxu0 0.0
        %562 = vmatpush.msra.mxu0 0.0
        %563 = vmatpush.msra.mxu0 0.0
        %564 = vmatpush.msra.mxu0 0.0
        %565 = vmatpush.msra.mxu0 0.0
        %566 = vmatpush.msra.mxu0 0.0
        %567 = vmatpush.msra.mxu0 0.0
        %568 = vmatpush.msra.mxu0 %v327
        %569 = vmatmul.f32.gmra.mxu0 %v306
        %v570 = vpop.f32.mrf.mxu0
        %v571 = vadd.f32 %v235, %v570
        %572 = vdwg.mxu0
        %573 = vmatpush.msra.mxu0 0.0
        %574 = vmatpush.msra.mxu0 0.0
        %575 = vmatpush.msra.mxu0 0.0
        %576 = vmatpush.msra.mxu0 0.0
        %577 = vmatpush.msra.mxu0 0.0
        %578 = vmatpush.msra.mxu0 0.0
        %579 = vmatpush.msra.mxu0 0.0
        %580 = vmatpush.msra.mxu0 0.0
        %581 = vmatpush.msra.mxu0 0.0
        %582 = vmatpush.msra.mxu0 0.0
        %583 = vmatpush.msra.mxu0 0.0
        %584 = vmatpush.msra.mxu0 0.0
        %585 = vmatpush.msra.mxu0 0.0
        %586 = vmatpush.msra.mxu0 0.0
        %587 = vmatpush.msra.mxu0 0.0
        %588 = vmatpush.msra.mxu0 %v329
        %589 = vmatmul.f32.gmra.mxu0 %v306
        %v590 = vpop.f32.mrf.mxu0
        %v591 = vadd.f32 %v235, %v590
        %592 = vdwg.mxu0
        %593 = vmatpush.msra.mxu0 0.0
        %594 = vmatpush.msra.mxu0 0.0
        %595 = vmatpush.msra.mxu0 0.0
        %596 = vmatpush.msra.mxu0 0.0
        %597 = vmatpush.msra.mxu0 0.0
        %598 = vmatpush.msra.mxu0 0.0
        %599 = vmatpush.msra.mxu0 0.0
        %600 = vmatpush.msra.mxu0 0.0
        %601 = vmatpush.msra.mxu0 0.0
        %602 = vmatpush.msra.mxu0 0.0
        %603 = vmatpush.msra.mxu0 0.0
        %604 = vmatpush.msra.mxu0 0.0
        %605 = vmatpush.msra.mxu0 0.0
        %606 = vmatpush.msra.mxu0 0.0
        %607 = vmatpush.msra.mxu0 0.0
        %608 = vmatpush.msra.mxu0 %v331
        %609 = vmatmul.f32.gmra.mxu0 %v306
        %v610 = vpop.f32.mrf.mxu0
        %v611 = vadd.f32 %v235, %v610
        %612 = vdwg.mxu0
        %613 = vmatpush.msra.mxu0 0.0
        %614 = vmatpush.msra.mxu0 0.0
        %615 = vmatpush.msra.mxu0 0.0
        %616 = vmatpush.msra.mxu0 0.0
        %617 = vmatpush.msra.mxu0 0.0
        %618 = vmatpush.msra.mxu0 0.0
        %619 = vmatpush.msra.mxu0 0.0
        %620 = vmatpush.msra.mxu0 0.0
        %621 = vmatpush.msra.mxu0 0.0
        %622 = vmatpush.msra.mxu0 0.0
        %623 = vmatpush.msra.mxu0 0.0
        %624 = vmatpush.msra.mxu0 0.0
        %625 = vmatpush.msra.mxu0 0.0
        %626 = vmatpush.msra.mxu0 0.0
        %627 = vmatpush.msra.mxu0 0.0
        %628 = vmatpush.msra.mxu0 %v333
        %629 = vmatmul.f32.gmra.mxu0 %v306
        %v630 = vpop.f32.mrf.mxu0
        %v631 = vadd.f32 %v235, %v630
        %632 = vdwg.mxu0
        %633 = vmatpush.msra.mxu0 0.0
        %634 = vmatpush.msra.mxu0 0.0
        %635 = vmatpush.msra.mxu0 0.0
        %636 = vmatpush.msra.mxu0 0.0
        %637 = vmatpush.msra.mxu0 0.0
        %638 = vmatpush.msra.mxu0 0.0
        %639 = vmatpush.msra.mxu0 0.0
        %640 = vmatpush.msra.mxu0 0.0
        %641 = vmatpush.msra.mxu0 0.0
        %642 = vmatpush.msra.mxu0 0.0
        %643 = vmatpush.msra.mxu0 0.0
        %644 = vmatpush.msra.mxu0 0.0
        %645 = vmatpush.msra.mxu0 0.0
        %646 = vmatpush.msra.mxu0 0.0
        %647 = vmatpush.msra.mxu0 0.0
        %648 = vmatpush.msra.mxu0 %v335
        %649 = vmatmul.f32.gmra.mxu0 %v306
        %v650 = vpop.f32.mrf.mxu0
        %v651 = vadd.f32 %v235, %v650
        %652 = vdwg.mxu0
        %653 = vmatpush.msra.mxu0 0.0
        %654 = vmatpush.msra.mxu0 0.0
        %655 = vmatpush.msra.mxu0 0.0
        %656 = vmatpush.msra.mxu0 0.0
        %657 = vmatpush.msra.mxu0 0.0
        %658 = vmatpush.msra.mxu0 0.0
        %659 = vmatpush.msra.mxu0 0.0
        %660 = vmatpush.msra.mxu0 0.0
        %661 = vmatpush.msra.mxu0 0.0
        %662 = vmatpush.msra.mxu0 0.0
        %663 = vmatpush.msra.mxu0 0.0
        %664 = vmatpush.msra.mxu0 0.0
        %665 = vmatpush.msra.mxu0 0.0
        %666 = vmatpush.msra.mxu0 0.0
        %667 = vmatpush.msra.mxu0 0.0
        %668 = vmatpush.msra.mxu0 %v337
        %669 = vmatmul.f32.gmra.mxu0 %v306
        %v670 = vpop.f32.mrf.mxu0
        %v671 = vadd.f32 %v235, %v670
        %672 = vdwg.mxu0
        %673 = vmatpush.msra.mxu0 0.0
        %674 = vmatpush.msra.mxu0 0.0
        %675 = vmatpush.msra.mxu0 0.0
        %676 = vmatpush.msra.mxu0 0.0
        %677 = vmatpush.msra.mxu0 0.0
        %678 = vmatpush.msra.mxu0 0.0
        %679 = vmatpush.msra.mxu0 0.0
        %680 = vmatpush.msra.mxu0 0.0
        %681 = vmatpush.msra.mxu0 0.0
        %682 = vmatpush.msra.mxu0 0.0
        %683 = vmatpush.msra.mxu0 0.0
        %684 = vmatpush.msra.mxu0 0.0
        %685 = vmatpush.msra.mxu0 0.0
        %686 = vmatpush.msra.mxu0 0.0
        %687 = vmatpush.msra.mxu0 0.0
        %688 = vmatpush.msra.mxu0 %v339
        %689 = vmatmul.f32.gmra.mxu0 %v306
        %v690 = vpop.f32.mrf.mxu0
        %v691 = vadd.f32 %v235, %v690
        %692 = vdwg.mxu0
        %693 = vmatpush.msra.mxu0 0.0
        %694 = vmatpush.msra.mxu0 0.0
        %695 = vmatpush.msra.mxu0 0.0
        %696 = vmatpush.msra.mxu0 0.0
        %697 = vmatpush.msra.mxu0 0.0
        %698 = vmatpush.msra.mxu0 0.0
        %699 = vmatpush.msra.mxu0 0.0
        %700 = vmatpush.msra.mxu0 0.0
        %701 = vmatpush.msra.mxu0 0.0
        %702 = vmatpush.msra.mxu0 0.0
        %703 = vmatpush.msra.mxu0 0.0
        %704 = vmatpush.msra.mxu0 0.0
        %705 = vmatpush.msra.mxu0 0.0
        %706 = vmatpush.msra.mxu0 0.0
        %707 = vmatpush.msra.mxu0 0.0
        %708 = vmatpush.msra.mxu0 %v341
        %709 = vmatmul.f32.gmra.mxu0 %v306
        %v710 = vpop.f32.mrf.mxu0
        %v711 = vadd.f32 %v235, %v710
        %712 = vdwg.mxu0
        %713 = vmatpush.msra.mxu0 0.0
        %714 = vmatpush.msra.mxu0 0.0
        %715 = vmatpush.msra.mxu0 0.0
        %716 = vmatpush.msra.mxu0 0.0
        %717 = vmatpush.msra.mxu0 0.0
        %718 = vmatpush.msra.mxu0 0.0
        %719 = vmatpush.msra.mxu0 0.0
        %720 = vmatpush.msra.mxu0 0.0
        %721 = vmatpush.msra.mxu0 0.0
        %722 = vmatpush.msra.mxu0 0.0
        %723 = vmatpush.msra.mxu0 0.0
        %724 = vmatpush.msra.mxu0 0.0
        %725 = vmatpush.msra.mxu0 0.0
        %726 = vmatpush.msra.mxu0 0.0
        %727 = vmatpush.msra.mxu0 0.0
        %728 = vmatpush.msra.mxu0 %v343
        %729 = vmatmul.f32.gmra.mxu0 %v306
        %v730 = vpop.f32.mrf.mxu0
        %v731 = vadd.f32 %v235, %v730
        %732 = vdwg.mxu0
        %733 = vmatpush.msra.mxu0 0.0
        %734 = vmatpush.msra.mxu0 0.0
        %735 = vmatpush.msra.mxu0 0.0
        %736 = vmatpush.msra.mxu0 0.0
        %737 = vmatpush.msra.mxu0 0.0
        %738 = vmatpush.msra.mxu0 0.0
        %739 = vmatpush.msra.mxu0 0.0
        %740 = vmatpush.msra.mxu0 0.0
        %741 = vmatpush.msra.mxu0 0.0
        %742 = vmatpush.msra.mxu0 0.0
        %743 = vmatpush.msra.mxu0 0.0
        %744 = vmatpush.msra.mxu0 0.0
        %745 = vmatpush.msra.mxu0 0.0
        %746 = vmatpush.msra.mxu0 0.0
        %747 = vmatpush.msra.mxu0 0.0
        %748 = vmatpush.msra.mxu0 %v345
        %749 = vmatmul.f32.gmra.mxu0 %v306
        %v750 = vpop.f32.mrf.mxu0
        %v751 = vadd.f32 %v235, %v750
        %752 = vdwg.mxu0
        %753 = vmatpush.msra.mxu0 0.0
        %754 = vmatpush.msra.mxu0 0.0
        %755 = vmatpush.msra.mxu0 0.0
        %756 = vmatpush.msra.mxu0 0.0
        %757 = vmatpush.msra.mxu0 0.0
        %758 = vmatpush.msra.mxu0 0.0
        %759 = vmatpush.msra.mxu0 0.0
        %760 = vmatpush.msra.mxu0 0.0
        %761 = vmatpush.msra.mxu0 0.0
        %762 = vmatpush.msra.mxu0 0.0
        %763 = vmatpush.msra.mxu0 0.0
        %764 = vmatpush.msra.mxu0 0.0
        %765 = vmatpush.msra.mxu0 0.0
        %766 = vmatpush.msra.mxu0 0.0
        %767 = vmatpush.msra.mxu0 0.0
        %768 = vmatpush.msra.mxu0 %v347
        %769 = vmatmul.f32.gmra.mxu0 %v306
        %v770 = vpop.f32.mrf.mxu0
        %v771 = vadd.f32 %v235, %v770
        %772 = vdwg.mxu0
        %773 = vmatpush.msra.mxu0 0.0
        %774 = vmatpush.msra.mxu0 0.0
        %775 = vmatpush.msra.mxu0 0.0
        %776 = vmatpush.msra.mxu0 0.0
        %777 = vmatpush.msra.mxu0 0.0
        %778 = vmatpush.msra.mxu0 0.0
        %779 = vmatpush.msra.mxu0 0.0
        %780 = vmatpush.msra.mxu0 0.0
        %781 = vmatpush.msra.mxu0 0.0
        %782 = vmatpush.msra.mxu0 0.0
        %783 = vmatpush.msra.mxu0 0.0
        %784 = vmatpush.msra.mxu0 0.0
        %785 = vmatpush.msra.mxu0 0.0
        %786 = vmatpush.msra.mxu0 0.0
        %787 = vmatpush.msra.mxu0 0.0
        %788 = vmatpush.msra.mxu0 %v349
        %789 = vmatmul.f32.gmra.mxu0 %v306
        %v790 = vpop.f32.mrf.mxu0
        %v791 = vadd.f32 %v235, %v790
        %792 = vdwg.mxu0
        %793 = vmatpush.msra.mxu0 0.0
        %794 = vmatpush.msra.mxu0 0.0
        %795 = vmatpush.msra.mxu0 0.0
        %796 = vmatpush.msra.mxu0 0.0
        %797 = vmatpush.msra.mxu0 0.0
        %798 = vmatpush.msra.mxu0 0.0
        %799 = vmatpush.msra.mxu0 0.0
        %800 = vmatpush.msra.mxu0 0.0
        %801 = vmatpush.msra.mxu0 0.0
        %802 = vmatpush.msra.mxu0 0.0
        %803 = vmatpush.msra.mxu0 0.0
        %804 = vmatpush.msra.mxu0 0.0
        %805 = vmatpush.msra.mxu0 0.0
        %806 = vmatpush.msra.mxu0 0.0
        %807 = vmatpush.msra.mxu0 0.0
        %808 = vmatpush.msra.mxu0 %v351
        %809 = vmatmul.f32.gmra.mxu0 %v306
        %v810 = vpop.f32.mrf.mxu0
        %v811 = vadd.f32 %v235, %v810
        %812 = vdwg.mxu0
        %813 = vmatpush.msra.mxu0 0.0
        %814 = vmatpush.msra.mxu0 0.0
        %815 = vmatpush.msra.mxu0 0.0
        %816 = vmatpush.msra.mxu0 0.0
        %817 = vmatpush.msra.mxu0 0.0
        %818 = vmatpush.msra.mxu0 0.0
        %819 = vmatpush.msra.mxu0 0.0
        %820 = vmatpush.msra.mxu0 0.0
        %821 = vmatpush.msra.mxu0 0.0
        %822 = vmatpush.msra.mxu0 0.0
        %823 = vmatpush.msra.mxu0 0.0
        %824 = vmatpush.msra.mxu0 0.0
        %825 = vmatpush.msra.mxu0 0.0
        %826 = vmatpush.msra.mxu0 0.0
        %827 = vmatpush.msra.mxu0 0.0
        %828 = vmatpush.msra.mxu0 %v353
        %829 = vmatmul.f32.gmra.mxu0 %v306
        %v830 = vpop.f32.mrf.mxu0
        %v831 = vadd.f32 %v235, %v830
        %832 = vdwg.mxu0
        %833 = vmatpush.msra.mxu0 0.0
        %834 = vmatpush.msra.mxu0 0.0
        %835 = vmatpush.msra.mxu0 0.0
        %836 = vmatpush.msra.mxu0 0.0
        %837 = vmatpush.msra.mxu0 0.0
        %838 = vmatpush.msra.mxu0 0.0
        %839 = vmatpush.msra.mxu0 0.0
        %840 = vmatpush.msra.mxu0 0.0
        %841 = vmatpush.msra.mxu0 0.0
        %842 = vmatpush.msra.mxu0 0.0
        %843 = vmatpush.msra.mxu0 0.0
        %844 = vmatpush.msra.mxu0 0.0
        %845 = vmatpush.msra.mxu0 0.0
        %846 = vmatpush.msra.mxu0 0.0
        %847 = vmatpush.msra.mxu0 0.0
        %848 = vmatpush.msra.mxu0 %v355
        %849 = vmatmul.f32.gmra.mxu0 %v306
        %v850 = vpop.f32.mrf.mxu0
        %v851 = vadd.f32 %v235, %v850
        %852 = vdwg.mxu0
        %853 = vmatpush.msra.mxu0 0.0
        %854 = vmatpush.msra.mxu0 0.0
        %855 = vmatpush.msra.mxu0 0.0
        %856 = vmatpush.msra.mxu0 0.0
        %857 = vmatpush.msra.mxu0 0.0
        %858 = vmatpush.msra.mxu0 0.0
        %859 = vmatpush.msra.mxu0 0.0
        %860 = vmatpush.msra.mxu0 0.0
        %861 = vmatpush.msra.mxu0 0.0
        %862 = vmatpush.msra.mxu0 0.0
        %863 = vmatpush.msra.mxu0 0.0
        %864 = vmatpush.msra.mxu0 0.0
        %865 = vmatpush.msra.mxu0 0.0
        %866 = vmatpush.msra.mxu0 0.0
        %867 = vmatpush.msra.mxu0 0.0
        %868 = vmatpush.msra.mxu0 %v357
        %869 = vmatmul.f32.gmra.mxu0 %v306
        %v870 = vpop.f32.mrf.mxu0
        %v871 = vadd.f32 %v235, %v870
        %872 = vdwg.mxu0
        %873 = vmatpush.msra.mxu0 0.0
        %874 = vmatpush.msra.mxu0 0.0
        %875 = vmatpush.msra.mxu0 0.0
        %876 = vmatpush.msra.mxu0 0.0
        %877 = vmatpush.msra.mxu0 0.0
        %878 = vmatpush.msra.mxu0 0.0
        %879 = vmatpush.msra.mxu0 0.0
        %880 = vmatpush.msra.mxu0 0.0
        %881 = vmatpush.msra.mxu0 0.0
        %882 = vmatpush.msra.mxu0 0.0
        %883 = vmatpush.msra.mxu0 0.0
        %884 = vmatpush.msra.mxu0 0.0
        %885 = vmatpush.msra.mxu0 0.0
        %886 = vmatpush.msra.mxu0 0.0
        %887 = vmatpush.msra.mxu0 0.0
        %888 = vmatpush.msra.mxu0 %v359
        %889 = vmatmul.f32.gmra.mxu0 %v306
        %v890 = vpop.f32.mrf.mxu0
        %v891 = vadd.f32 %v235, %v890
        %892 = vdwg.mxu0
        %893 = vmatpush.msra.mxu0 0.0
        %894 = vmatpush.msra.mxu0 0.0
        %895 = vmatpush.msra.mxu0 0.0
        %896 = vmatpush.msra.mxu0 0.0
        %897 = vmatpush.msra.mxu0 0.0
        %898 = vmatpush.msra.mxu0 0.0
        %899 = vmatpush.msra.mxu0 0.0
        %900 = vmatpush.msra.mxu0 0.0
        %901 = vmatpush.msra.mxu0 0.0
        %902 = vmatpush.msra.mxu0 0.0
        %903 = vmatpush.msra.mxu0 0.0
        %904 = vmatpush.msra.mxu0 0.0
        %905 = vmatpush.msra.mxu0 0.0
        %906 = vmatpush.msra.mxu0 0.0
        %907 = vmatpush.msra.mxu0 0.0
        %908 = vmatpush.msra.mxu0 %v361
        %909 = vmatmul.f32.gmra.mxu0 %v306
        %v910 = vpop.f32.mrf.mxu0
        %v911 = vadd.f32 %v235, %v910
        %912 = vdwg.mxu0
        %913 = vmatpush.msra.mxu0 0.0
        %914 = vmatpush.msra.mxu0 0.0
        %915 = vmatpush.msra.mxu0 0.0
        %916 = vmatpush.msra.mxu0 0.0
        %917 = vmatpush.msra.mxu0 0.0
        %918 = vmatpush.msra.mxu0 0.0
        %919 = vmatpush.msra.mxu0 0.0
        %920 = vmatpush.msra.mxu0 0.0
        %921 = vmatpush.msra.mxu0 0.0
        %922 = vmatpush.msra.mxu0 0.0
        %923 = vmatpush.msra.mxu0 0.0
        %924 = vmatpush.msra.mxu0 0.0
        %925 = vmatpush.msra.mxu0 0.0
        %926 = vmatpush.msra.mxu0 0.0
        %927 = vmatpush.msra.mxu0 0.0
        %928 = vmatpush.msra.mxu0 %v363
        %929 = vmatmul.f32.gmra.mxu0 %v306
        %v930 = vpop.f32.mrf.mxu0
        %v931 = vadd.f32 %v235, %v930
        %932 = vdwg.mxu0
        %933 = vmatpush.msra.mxu0 0.0
        %934 = vmatpush.msra.mxu0 0.0
        %935 = vmatpush.msra.mxu0 0.0
        %936 = vmatpush.msra.mxu0 0.0
        %937 = vmatpush.msra.mxu0 0.0
        %938 = vmatpush.msra.mxu0 0.0
        %939 = vmatpush.msra.mxu0 0.0
        %940 = vmatpush.msra.mxu0 0.0
        %941 = vmatpush.msra.mxu0 0.0
        %942 = vmatpush.msra.mxu0 0.0
        %943 = vmatpush.msra.mxu0 0.0
        %944 = vmatpush.msra.mxu0 0.0
        %945 = vmatpush.msra.mxu0 0.0
        %946 = vmatpush.msra.mxu0 0.0
        %947 = vmatpush.msra.mxu0 0.0
        %948 = vmatpush.msra.mxu0 %v365
        %949 = vmatmul.f32.gmra.mxu0 %v306
        %v950 = vpop.f32.mrf.mxu0
        %v951 = vadd.f32 %v235, %v950
        %952 = vdwg.mxu0
        %953 = vmatpush.msra.mxu0 0.0
        %954 = vmatpush.msra.mxu0 0.0
        %955 = vmatpush.msra.mxu0 0.0
        %956 = vmatpush.msra.mxu0 0.0
        %957 = vmatpush.msra.mxu0 0.0
        %958 = vmatpush.msra.mxu0 0.0
        %959 = vmatpush.msra.mxu0 0.0
        %960 = vmatpush.msra.mxu0 0.0
        %961 = vmatpush.msra.mxu0 0.0
        %962 = vmatpush.msra.mxu0 0.0
        %963 = vmatpush.msra.mxu0 0.0
        %964 = vmatpush.msra.mxu0 0.0
        %965 = vmatpush.msra.mxu0 0.0
        %966 = vmatpush.msra.mxu0 0.0
        %967 = vmatpush.msra.mxu0 0.0
        %968 = vmatpush.msra.mxu0 %v367
        %969 = vmatmul.f32.gmra.mxu0 %v306
        %v970 = vpop.f32.mrf.mxu0
        %v971 = vadd.f32 %v235, %v970
        %972 = vdwg.mxu0
        %973 = vmatpush.msra.mxu0 0.0
        %974 = vmatpush.msra.mxu0 0.0
        %975 = vmatpush.msra.mxu0 0.0
        %976 = vmatpush.msra.mxu0 0.0
        %977 = vmatpush.msra.mxu0 0.0
        %978 = vmatpush.msra.mxu0 0.0
        %979 = vmatpush.msra.mxu0 0.0
        %980 = vmatpush.msra.mxu0 0.0
        %981 = vmatpush.msra.mxu0 0.0
        %982 = vmatpush.msra.mxu0 0.0
        %983 = vmatpush.msra.mxu0 0.0
        %984 = vmatpush.msra.mxu0 0.0
        %985 = vmatpush.msra.mxu0 0.0
        %986 = vmatpush.msra.mxu0 0.0
        %987 = vmatpush.msra.mxu0 0.0
        %988 = vmatpush.msra.mxu0 %v369
        %989 = vmatmul.f32.gmra.mxu0 %v306
        %v990 = vpop.f32.mrf.mxu0
        %v991 = vadd.f32 %v235, %v990
        %992 = vdwg.mxu0
        %993 = vmatpush.msra.mxu0 0.0
        %994 = vmatpush.msra.mxu0 0.0
        %995 = vmatpush.msra.mxu0 0.0
        %996 = vmatpush.msra.mxu0 0.0
        %997 = vmatpush.msra.mxu0 0.0
        %998 = vmatpush.msra.mxu0 0.0
        %999 = vmatpush.msra.mxu0 0.0
        %1000 = vmatpush.msra.mxu0 0.0
        %1001 = vmatpush.msra.mxu0 0.0
        %1002 = vmatpush.msra.mxu0 0.0
        %1003 = vmatpush.msra.mxu0 0.0
        %1004 = vmatpush.msra.mxu0 0.0
        %1005 = vmatpush.msra.mxu0 0.0
        %1006 = vmatpush.msra.mxu0 0.0
        %1007 = vmatpush.msra.mxu0 0.0
        %1008 = vmatpush.msra.mxu0 %v371
        %1009 = vmatmul.f32.gmra.mxu0 %v306
        %v1010 = vpop.f32.mrf.mxu0
        %v1011 = vadd.f32 %v235, %v1010
        %1012 = vdwg.mxu0
        %v1013 = vmax.f32 %v391, 0.0
        %v1014 = vmax.f32 %v411, 0.0
        %v1015 = vmax.f32 %v431, 0.0
        %v1016 = vmax.f32 %v451, 0.0
        %v1017 = vmax.f32 %v471, 0.0
        %v1018 = vmax.f32 %v491, 0.0
        %v1019 = vmax.f32 %v511, 0.0
        %v1020 = vmax.f32 %v531, 0.0
        %v1021 = vmax.f32 %v551, 0.0
        %v1022 = vmax.f32 %v571, 0.0
        %v1023 = vmax.f32 %v591, 0.0
        %v1024 = vmax.f32 %v611, 0.0
        %v1025 = vmax.f32 %v631, 0.0
        %v1026 = vmax.f32 %v651, 0.0
        %v1027 = vmax.f32 %v671, 0.0
        %v1028 = vmax.f32 %v691, 0.0
        %v1029 = vmax.f32 %v711, 0.0
        %v1030 = vmax.f32 %v731, 0.0
        %v1031 = vmax.f32 %v751, 0.0
        %v1032 = vmax.f32 %v771, 0.0
        %v1033 = vmax.f32 %v791, 0.0
        %v1034 = vmax.f32 %v811, 0.0
        %v1035 = vmax.f32 %v831, 0.0
        %v1036 = vmax.f32 %v851, 0.0
        %v1037 = vmax.f32 %v871, 0.0
        %v1038 = vmax.f32 %v891, 0.0
        %v1039 = vmax.f32 %v911, 0.0
        %v1040 = vmax.f32 %v931, 0.0
        %v1041 = vmax.f32 %v951, 0.0
        %v1042 = vmax.f32 %v971, 0.0
        %v1043 = vmax.f32 %v991, 0.0
        %v1044 = vmax.f32 %v1011, 0.0
        %v1045 = vadd.f32 %v1013, %v1014
        %v1046 = vadd.f32 %v1045, %v1015
        %v1047 = vadd.f32 %v1046, %v1016
        %v1048 = vadd.f32 %v1047, %v1017
        %v1049 = vadd.f32 %v1048, %v1018
        %v1050 = vadd.f32 %v1049, %v1019
        %v1051 = vadd.f32 %v1050, %v1020
        %v1052 = vadd.f32 %v1051, %v1021
        %v1053 = vadd.f32 %v1052, %v1022
        %v1054 = vadd.f32 %v1053, %v1023
        %v1055 = vadd.f32 %v1054, %v1024
        %v1056 = vadd.f32 %v1055, %v1025
        %v1057 = vadd.f32 %v1056, %v1026
        %v1058 = vadd.f32 %v1057, %v1027
        %v1059 = vadd.f32 %v1058, %v1028
        %v1060 = vadd.f32 %v1059, %v1029
        %v1061 = vadd.f32 %v1060, %v1030
        %v1062 = vadd.f32 %v1061, %v1031
        %v1063 = vadd.f32 %v1062, %v1032
        %v1064 = vadd.f32 %v1063, %v1033
        %v1065 = vadd.f32 %v1064, %v1034
        %v1066 = vadd.f32 %v1065, %v1035
        %v1067 = vadd.f32 %v1066, %v1036
        %v1068 = vadd.f32 %v1067, %v1037
        %v1069 = vadd.f32 %v1068, %v1038
        %v1070 = vadd.f32 %v1069, %v1039
        %v1071 = vadd.f32 %v1070, %v1040
        %v1072 = vadd.f32 %v1071, %v1041
        %v1073 = vadd.f32 %v1072, %v1042
        %v1074 = vadd.f32 %v1073, %v1043
        %v1075 = vadd.f32 %v1074, %v1044
        %1076 = vadd.xlane.f32.xlu0 %v1075
        %v1077 = vpop.xlane.xlu0 %1076
        %vm1078 = vcmask 7168
        %1079 = vst.msk [vmem:[%s213] sm:$0xff] %vm1078, %v1077
        %p1080 = scmp.lt.s32.totalorder %s21, 1
        %s1081 = scalar_select %p1080, %s21, 1
        %p1082 = scmp.lt.s32.totalorder %s22, 0
        %s1083 = scalar_select %p1082, %s22, 0
        %s1084 = sadd.s32 %s1083, %s1081
        %s1085 = smul.addr %s1084, 8
        %s1086 = scalar_lea.vmem %s3, %s1085
        // Predicated region
        $region37: #{tpu_custom_call.1} parent=31 // pred_check
          %p1087 = pneg %p119
        $region38: #{tpu_custom_call.1} parent=31 // pred_check_branch
          %1089 = sbr.rel (%p1087) target = $region40
        $region39: #{tpu_custom_call.1} parent=31 // pred_region
          _
        $region40: #{tpu_custom_call.1} parent=31 // pred_fallthru
          _
      $region32: #{tpu_custom_call.1} parent=5 // pred_fallthru
        _
      %p1090 = scmp.le.s32.totalorder 2, %s12
      // Predicated region
      $region41: #{tpu_custom_call.1} parent=5 // pred_check
        %p1091 = pneg %p1090
      $region42: #{tpu_custom_call.1} parent=5 // pred_check_branch
        %1093 = sbr.rel (%p1091) target = $region44
      $region43: #{tpu_custom_call.1} parent=5 // pred_region
        %s1094 = ssub.s32 %s12, 2
        // Predicated region
        $region45: #{tpu_custom_call.1} parent=43 // pred_check
          %p1095 = pneg %p125
        $region46: #{tpu_custom_call.1} parent=43 // pred_check_branch
          %1097 = sbr.rel (%p1095) target = $region48
        $region47: #{tpu_custom_call.1} parent=43 // pred_region
          %p1098 = scmp.lt.s32.totalorder %s23, 1
          %s1099 = scalar_select %p1098, %s23, 1
          %p1100 = scmp.lt.s32.totalorder %s24, 0
          %s1101 = scalar_select %p1100, %s24, 0
          %s1102 = sadd.s32 %s1101, %s1099
          %s1103 = smul.addr %s1102, 8
          %s1104 = scalar_lea.vmem %s3, %s1103
        $region48: #{tpu_custom_call.1} parent=43 // pred_fallthru
          _
      $region44: #{tpu_custom_call.1} parent=5 // pred_fallthru
        _
    $region6: #{tpu_custom_call.1} parent=1 // loop_footer
      %s16 = sadd.s32 1, %s12
    $region7: #{tpu_custom_call.1} parent=1 // loop_footer_branch
      %11 = sbr.rel target = $region3
    $region8: #{tpu_custom_call.1} parent=1 // loop_exit
      _
    %1105 = vsyncpa [#allocation3], 1
    %s1106 = scalar_lea.sflag [#allocation3], 1
    %1107 = vsyncpa %s1106, 1

</llo_original>
